<compile_context>
chip_gen: v6e
topology: v6e:2x2x1
jax: 0.10.0
libtpu: 0.0.40
codegen_flags: <defaults>
</compile_context>

<pallas_src>
import jax
import jax.numpy as jnp
from jax import lax
from jax.experimental import pallas as pl
from jax.experimental.pallas import tpu as pltpu


def _round_up(x, m):
    return ((x + m - 1) // m) * m


def _sublane_mult(dtype):
    # Second-to-last-dim alignment: f32 -> 8, bf16 -> 16, int8/fp8 -> 32.
    return 8 * max(1, 4 // jnp.dtype(dtype).itemsize)


def _nonlinear_input_kernel(x_ref, wt_ref, b_ref, o_ref):
    # x_ref: (TB, nin)   wt_ref: (nin, nout_p)   b_ref: (1, nout_p)   o_ref: (TB, nout_p)
    x = x_ref[...].astype(jnp.float32)                 # x.float() folded into kernel
    # Plain (TB,K)x(K,N) contraction on the MXU, full f32 fidelity (HBM-bound, so
    # the multi-pass f32 emulation is free versus DMA time).
    z = jnp.dot(x, wt_ref[...].astype(jnp.float32),
                preferred_element_type=jnp.float32,
                precision=lax.Precision.HIGHEST)
    z = z + b_ref[...].astype(jnp.float32)             # (1, nout) broadcast over rows
    h = jnp.maximum(z, 0.0)                            # ReLU (VPU)
    # sigmoid(h) for h >= 0: exp(-h) in (0,1], denom in (1,2] -> no stability selects
    # needed; exp + approx reciprocal both live on the EUP slot.
    s = pl.reciprocal(1.0 + jnp.exp(-h), approx=True)
    o_ref[...] = (1.0 + s * 4.0).astype(o_ref.dtype)


def nonlinear_input_forward(x, weight, bias, *, tb=8192, out_dtype=jnp.float32):
    """x: [B, nin] (any float dtype), weight: [nout, nin], bias: [nout].

    Returns out_dtype [B, nout] = 1 + sigmoid(relu(x.float() @ W^T + b)) * 4.
    (out_dtype=jnp.bfloat16 halves output HBM bytes if the consumer allows it.)
    """
    B, nin = x.shape
    nout = weight.shape[0]
    nout_p = _round_up(nout, 128)                      # lane-dense output store

    # One-time (tiny) layout prep, outside the per-grid-step path:
    #   W^T -> (nin, nout_p) f32, bias -> (1, nout_p) f32, lane-padded with zeros.
    w_t = jnp.swapaxes(weight, 0, 1).astype(jnp.float32)
    b2 = bias.reshape(1, nout).astype(jnp.float32)
    if nout_p != nout:
        w_t = jnp.pad(w_t, ((0, 0), (0, nout_p - nout)))
        b2 = jnp.pad(b2, ((0, 0), (0, nout_p - nout)))

    # ----- generation-aware batch-tile budget (lane-padding aware) -------------
    row_align = max(_sublane_mult(x.dtype), _sublane_mult(out_dtype))
    x_row = _round_up(nin, 128) * jnp.dtype(x.dtype).itemsize        # bytes / row in VMEM
    o_row = nout_p * jnp.dtype(out_dtype).itemsize
    per_row = 2 * (x_row + o_row)                      # double-buffered x + out tiles
    try:
        vmem_cap = int(pltpu.get_tpu_info().vmem_capacity_bytes)     # 128 MiB v5e/v6e, 64 MiB v7x
    except Exception:
        vmem_cap = 64 << 20                            # conservative fallback
    tile_budget = vmem_cap // 4
    tb_budget = max(row_align, (tile_budget // per_row) // row_align * row_align)

    TB = min(int(tb), tb_budget)
    TB = max(row_align, (TB // row_align) * row_align)
    if B <= TB:
        if B >= 2 * row_align:
            # Guarantee >=2 grid steps so the "parallel" batch axis can feed both
            # TensorCores on v7x; harmless elsewhere.
            TB = row_align * pl.cdiv(pl.cdiv(B, 2), row_align)
        else:
            TB = B
    grid = (pl.cdiv(B, TB),)

    # Explicit scoped-VMEM limit: x/out double-buffered, weight/bias single-buffered.
    w_bytes = _round_up(nin, 8) * nout_p * 4
    b_bytes = 8 * nout_p * 4
    vmem_needed = TB * per_row + w_bytes + b_bytes
    vmem_limit = int(min(vmem_cap, max(vmem_needed + (8 << 20), 32 << 20)))

    out = pl.pallas_call(
        _nonlinear_input_kernel,
        out_shape=jax.ShapeDtypeStruct((B, nout_p), out_dtype),
        grid_spec=pltpu.PrefetchScalarGridSpec(
            num_scalar_prefetch=0,
            grid=grid,
            in_specs=[
                # batch-tiled x: double-buffered by the pipeline
                pl.BlockSpec((TB, nin), lambda i: (i, 0)),
                # grid-invariant weight/bias: VMEM-resident, single-buffered
                pl.BlockSpec((nin, nout_p), lambda i: (0, 0),
                             pipeline_mode=pl.Buffered(1)),
                pl.BlockSpec((1, nout_p), lambda i: (0, 0),
                             pipeline_mode=pl.Buffered(1)),
            ],
            out_specs=pl.BlockSpec((TB, nout_p), lambda i: (i, 0)),
        ),
        compiler_params=pltpu.CompilerParams(
            dimension_semantics=("parallel",),         # batch axis -> v7x 2-TC sharding
            vmem_limit_bytes=vmem_limit,
        ),
    )(x, w_t, b2)

    if nout_p != nout:
        out = out[:, :nout]
    return out


if __name__ == "__main__":
    # Small shapes consistent with the module: Linear(nin=32, nout=128).
    # B=32 lets the >=2-grid-step rule kick in (TB=16, grid=(2,)) so the pipelined,
    # megacore-parallel path is exercised even at demo scale.
    B, NIN, NOUT = 32, 32, 128

    key = jax.random.PRNGKey(0)
    kx, kw, kb = jax.random.split(key, 3)

    # Deterministic synthetic parameters (kaiming-uniform-ish scale, like nn.Linear).
    bound = 1.0 / jnp.sqrt(jnp.float32(NIN))
    weight = jax.random.uniform(kw, (NOUT, NIN), jnp.float32, -bound, bound)
    bias = jax.random.uniform(kb, (NOUT,), jnp.float32, -bound, bound)

    x = jax.random.normal(kx, (B, NIN), jnp.float32)

    out = nonlinear_input_forward(x, weight, bias)
    out = jax.block_until_ready(out)

    # Pure-JAX f32 reference (eval-mode dropout = identity).
    ref = 1.0 + jax.nn.sigmoid(jnp.maximum(x @ weight.T + bias, 0.0)) * 4.0
    assert out.shape == (B, NOUT)
    # f32 HIGHEST matmul; tolerance dominated by the approx EUP reciprocal.
    assert jnp.allclose(out, ref, atol=1e-2, rtol=1e-2), "mismatch vs reference"

    print("KERNEL_OK")
</pallas_src>

<mosaic_0001>
module attributes {stable_mosaic.version = 11 : i64} {
  func.func @_nonlinear_input_kernel(%arg0: i32, %arg1: memref<16x32xf32, #tpu.memory_space<vmem>>, %arg2: memref<32x128xf32, #tpu.memory_space<vmem>>, %arg3: memref<1x128xf32, #tpu.memory_space<vmem>>, %arg4: memref<16x128xf32, #tpu.memory_space<vmem>>) attributes {dimension_semantics = [#tpu.dimension_semantics<parallel>], iteration_bounds = array<i64: 2>, scalar_prefetch = 0 : i64, scratch_operands = 0 : i64, tpu.core_type = #tpu.core_type<tc>, window_params = [{transform_indices = @transform_0, window_bounds = array<i64: 16, 32>}, {pipeline_mode = #tpu.pipeline_mode<synchronous>, transform_indices = @transform_1, window_bounds = array<i64: 32, 128>}, {pipeline_mode = #tpu.pipeline_mode<synchronous>, transform_indices = @transform_2, window_bounds = array<i64: 1, 128>}, {transform_indices = @transform_3, window_bounds = array<i64: 16, 128>}]} {
    %c0 = arith.constant 0 : index
    %c0_0 = arith.constant 0 : index
    %0 = vector.load %arg1[%c0, %c0_0] : memref<16x32xf32, #tpu.memory_space<vmem>>, vector<16x32xf32>
    %c0_1 = arith.constant 0 : index
    %c0_2 = arith.constant 0 : index
    %1 = vector.load %arg2[%c0_1, %c0_2] : memref<32x128xf32, #tpu.memory_space<vmem>>, vector<32x128xf32>
    %cst = arith.constant dense<0.000000e+00> : vector<16x128xf32>
    %2 = tpu.matmul %0, %1, %cst {dimension_numbers = #tpu.dot_dimension_numbers<[1], [0], [0], [1], [0, 0, 1, 1], [], []>, precision = #tpu.contract_precision<fp32>} : vector<16x32xf32>, vector<32x128xf32>, vector<16x128xf32> -> vector<16x128xf32>
    %c0_3 = arith.constant 0 : index
    %c0_4 = arith.constant 0 : index
    %3 = vector.load %arg3[%c0_3, %c0_4] : memref<1x128xf32, #tpu.memory_space<vmem>>, vector<1x128xf32>
    %4 = vector.broadcast %3 : vector<1x128xf32> to vector<16x128xf32>
    %5 = arith.addf %2, %4 : vector<16x128xf32>
    %cst_5 = arith.constant 0.000000e+00 : f32
    %6 = vector.broadcast %cst_5 : f32 to vector<16x128xf32>
    %7 = arith.maximumf %5, %6 : vector<16x128xf32>
    %cst_6 = arith.constant 0.000000e+00 : f32
    %8 = vector.broadcast %cst_6 : f32 to vector<16x128xf32>
    %9 = arith.subf %8, %7 : vector<16x128xf32>
    %10 = math.exp %9 : vector<16x128xf32>
    %cst_7 = arith.constant 1.000000e+00 : f32
    %11 = vector.broadcast %cst_7 : f32 to vector<16x128xf32>
    %12 = arith.addf %11, %10 : vector<16x128xf32>
    %13 = tpu.reciprocal %12 {approx = true} : vector<16x128xf32> -> vector<16x128xf32>
    %cst_8 = arith.constant 4.000000e+00 : f32
    %14 = vector.broadcast %cst_8 : f32 to vector<16x128xf32>
    %15 = arith.mulf %13, %14 : vector<16x128xf32>
    %cst_9 = arith.constant 1.000000e+00 : f32
    %16 = vector.broadcast %cst_9 : f32 to vector<16x128xf32>
    %17 = arith.addf %16, %15 : vector<16x128xf32>
    %c0_10 = arith.constant 0 : index
    %c0_11 = arith.constant 0 : index
    %18 = vector.load %arg4[%c0_10, %c0_11] : memref<16x128xf32, #tpu.memory_space<vmem>>, vector<16x128xf32>
    tpu.vector_store %arg4[%c0_10, %c0_11], %17 {strides = array<i32>} : memref<16x128xf32, #tpu.memory_space<vmem>>, vector<16x128xf32>,
    return
  }
  func.func @transform_0(%arg0: i32) -> (i32, i32) {
    %c0_i32 = arith.constant 0 : i32
    %c0_i32_0 = arith.constant 0 : i32
    return %arg0, %c0_i32 : i32, i32
  }
  func.func @transform_1(%arg0: i32) -> (i32, i32) {
    %c0_i32 = arith.constant 0 : i32
    %c0_i32_0 = arith.constant 0 : i32
    %c0_i32_1 = arith.constant 0 : i32
    return %c0_i32, %c0_i32_0 : i32, i32
  }
  func.func @transform_2(%arg0: i32) -> (i32, i32) {
    %c0_i32 = arith.constant 0 : i32
    %c0_i32_0 = arith.constant 0 : i32
    %c0_i32_1 = arith.constant 0 : i32
    return %c0_i32, %c0_i32_0 : i32, i32
  }
  func.func @transform_3(%arg0: i32) -> (i32, i32) {
    %c0_i32 = arith.constant 0 : i32
    %c0_i32_0 = arith.constant 0 : i32
    return %arg0, %c0_i32 : i32, i32
  }
}

</mosaic_0001>

<llo_original>
// kernel: tpu_custom_call.1
$region0: #{tpu_custom_call.1}
  #allocation0 [shape = 'u32[]', space=smem, size = 0x4, offset = 0x4, fixed_abs, tag = 'smem constant byte address 0x4 - core index']
  #allocation1 [shape = 'u32[144,128]{1,0:T(1,128)}', space=vmem, size = 0x12000, scoped, tag = 'internal scratch']
  %s0 = inlined_call_operand.hbm [shape: f32[32,32], index: 0, kind: input, shape index: {}]
  %s1 = inlined_call_operand.hbm [shape: f32[32,128], index: 1, kind: input, shape index: {}]
  %s2 = inlined_call_operand.vmem [shape: f32[1,128], index: 2, kind: input, shape index: {}]
  %s3 = inlined_call_operand.hbm [shape: f32[32,128], index: 3, kind: output, shape index: {}]
  %s4 = sld [smem:[#allocation0]]
  $region53: #{tpu_custom_call.1} parent=0
    _
  %s6 = ssub.s32 1, %s4
  %s7 = scalar_select 0, %s6, %s4
  $region1: #{tpu_custom_call.1} parent=0
    #allocation2 [shape = 'u8[16384]{0}', space=vmem, size = 0x4000, scoped, tag = 'input window, operand 0']
    #allocation3 [shape = 's32[2]{0}', space=sflag, size = 0x8, scoped, tag = 'scoped memory for tpu_custom_call.1']
    #allocation4 [shape = 's32[2]{0}', space=sflag, size = 0x8, scoped, tag = 'scoped memory for tpu_custom_call.1']
    #allocation5 [shape = 'u8[16384]{0}', space=vmem, size = 0x4000, scoped, tag = 'input window, operand 1, single buffered']
    #allocation6 [shape = 's32[1]{0}', space=sflag, size = 0x4, scoped, tag = 'scoped memory for tpu_custom_call.1']
    #allocation7 [shape = 'u8[16384]{0}', space=vmem, size = 0x4000, scoped, tag = 'output window, operand 0']
    %8 = vsyncpa [#allocation3], 0
    %s9 = scalar_lea.sflag [#allocation3], 1
    %10 = vsyncpa %s9, 0
    %11 = vsyncpa [#allocation6], 0
    %12 = vsyncpa [#allocation4], 0
    %s13 = scalar_lea.sflag [#allocation4], 1
    %14 = vsyncpa %s13, 0
    loop: start=0, step=1, limit=4
    $region2: #{tpu_custom_call.1} parent=1 // loop_pre_header
      _
    $region3: #{tpu_custom_call.1} parent=1 // loop_header
      %s16 = sphi 0, %s20
      %p17 = scmp.ge.s32.totalorder %s16, 4
      %s26 = sphi 0, %s28
      %s29 = sphi 0, %s26
      %s30 = sphi 0, %s29
      %s46 = sphi 0, %s30
      %s50 = sphi 0, %s50
      %s52 = sphi 0, %s50
      %s53 = sphi 0, %s52
      %s67 = sphi 0, %s53
      %s71 = sphi 0, %s71
      %s73 = sphi 0, %s71
      %s74 = sphi 0, %s73
      %s88 = sphi 0, %s74
      %s94 = sphi 0, %s96
      %s97 = sphi 0, %s94
      %s98 = sphi 0, %s97
      %s114 = sphi 0, %s98
    $region4: #{tpu_custom_call.1} parent=1 // loop_header_branch
      %19 = sbr.rel (%p17) target = $region8
    $region5: #{tpu_custom_call.1} parent=1 // loop_body
      %s21 = ssub.s32 %s16, 1
      %s22 = ssub.s32 %s16, 2
      %s23 = sadd.s32 %s16, 1
      %s24 = ssub.s32 %s16, %s23
      %p25 = scmp.eq.s32.totalorder %s24, 0
      %s27 = sadd.s32 %s26, 1
      %s28 = scalar_select %p25, %s26, %s27
      %p31 = pneg %p25
      %p32 = scmp.eq.s32.totalorder %s16, 1
      %p33 = por %p31, %p32
      %p34 = scmp.ne.s32.totalorder %s26, %s29
      %p35 = scmp.eq.s32.totalorder %s16, 0
      %p36 = por %p34, %p35
      %p37 = scmp.ne.s32.totalorder %s26, %s29
      %p38 = scmp.eq.s32.totalorder %s21, 1
      %p39 = por %p37, %p38
      %p40 = scmp.ne.s32.totalorder %s29, %s30
      %p41 = scmp.eq.s32.totalorder %s21, 0
      %p42 = por %p40, %p41
      %p43 = scmp.ne.s32.totalorder %s29, %s30
      %p44 = scmp.eq.s32.totalorder %s22, 1
      %p45 = por %p43, %p44
      %p47 = scmp.ne.s32.totalorder %s30, %s46
      %p48 = scmp.eq.s32.totalorder %s22, 0
      %p49 = por %p47, %p48
      %s51 = sadd.s32 %s50, 1
      %p54 = scmp.eq.s32.totalorder %s16, 1
      %p55 = scmp.ne.s32.totalorder %s50, %s52
      %p56 = scmp.eq.s32.totalorder %s16, 0
      %p57 = por %p55, %p56
      %p58 = scmp.ne.s32.totalorder %s50, %s52
      %p59 = scmp.eq.s32.totalorder %s21, 1
      %p60 = por %p58, %p59
      %p61 = scmp.ne.s32.totalorder %s52, %s53
      %p62 = scmp.eq.s32.totalorder %s21, 0
      %p63 = por %p61, %p62
      %p64 = scmp.ne.s32.totalorder %s52, %s53
      %p65 = scmp.eq.s32.totalorder %s22, 1
      %p66 = por %p64, %p65
      %p68 = scmp.ne.s32.totalorder %s53, %s67
      %p69 = scmp.eq.s32.totalorder %s22, 0
      %p70 = por %p68, %p69
      %s72 = sadd.s32 %s71, 1
      %p75 = scmp.eq.s32.totalorder %s16, 1
      %p76 = scmp.ne.s32.totalorder %s71, %s73
      %p77 = scmp.eq.s32.totalorder %s16, 0
      %p78 = por %p76, %p77
      %p79 = scmp.ne.s32.totalorder %s71, %s73
      %p80 = scmp.eq.s32.totalorder %s21, 1
      %p81 = por %p79, %p80
      %p82 = scmp.ne.s32.totalorder %s73, %s74
      %p83 = scmp.eq.s32.totalorder %s21, 0
      %p84 = por %p82, %p83
      %p85 = scmp.ne.s32.totalorder %s73, %s74
      %p86 = scmp.eq.s32.totalorder %s22, 1
      %p87 = por %p85, %p86
      %p89 = scmp.ne.s32.totalorder %s74, %s88
      %p90 = scmp.eq.s32.totalorder %s22, 0
      %p91 = por %p89, %p90
      %s92 = ssub.s32 %s16, %s23
      %p93 = scmp.eq.s32.totalorder %s92, 0
      %s95 = sadd.s32 %s94, 1
      %s96 = scalar_select %p93, %s94, %s95
      %p99 = pneg %p93
      %p100 = scmp.eq.s32.totalorder %s16, 1
      %p101 = por %p99, %p100
      %p102 = scmp.ne.s32.totalorder %s94, %s97
      %p103 = scmp.eq.s32.totalorder %s16, 0
      %p104 = por %p102, %p103
      %p105 = scmp.ne.s32.totalorder %s94, %s97
      %p106 = scmp.eq.s32.totalorder %s21, 1
      %p107 = por %p105, %p106
      %p108 = scmp.ne.s32.totalorder %s97, %s98
      %p109 = scmp.eq.s32.totalorder %s21, 0
      %p110 = por %p108, %p109
      %p111 = scmp.ne.s32.totalorder %s97, %s98
      %p112 = scmp.eq.s32.totalorder %s22, 1
      %p113 = por %p111, %p112
      %p115 = scmp.ne.s32.totalorder %s98, %s114
      %p116 = scmp.eq.s32.totalorder %s22, 0
      %p117 = por %p115, %p116
      %p118 = scmp.le.s32.totalorder 1, %s16
      %p119 = scmp.lt.s32.totalorder %s16, 3
      %p120 = pnand %p118, %p119
      %p121 = pneg %p120
      // Predicated region
      $region9: #{tpu_custom_call.1} parent=5 // pred_check
        _
      $region10: #{tpu_custom_call.1} parent=5 // pred_check_branch
        %123 = sbr.rel (%p120) target = $region12
      $region11: #{tpu_custom_call.1} parent=5 // pred_region
        %s124 = ssub.s32 %s16, 1
        // Predicated region
        $region13: #{tpu_custom_call.1} parent=11 // pred_check
          %p125 = pneg %p63
        $region14: #{tpu_custom_call.1} parent=11 // pred_check_branch
          %127 = sbr.rel (%p125) target = $region16
        $region15: #{tpu_custom_call.1} parent=11 // pred_region
          %s129 = ssub.s32 512, 512
          %130 = vsyncadd [#allocation6], %s129
          %s131 = sshll.u32 [#allocation5], 4
          %s132 = int_to_ptr.vmem [resolvable:$true] %s131
          %137 = dma.hbm_to_vmem [thread:$0]  %s1, 512, %s132, [#allocation6], 128, 128, 8
        $region16: #{tpu_custom_call.1} parent=11 // pred_fallthru
          _
        // Predicated region
        $region17: #{tpu_custom_call.1} parent=11 // pred_check
          %p138 = pneg %p84
        $region18: #{tpu_custom_call.1} parent=11 // pred_check_branch
          %140 = sbr.rel (%p138) target = $region20
        $region19: #{tpu_custom_call.1} parent=11 // pred_region
          _
        $region20: #{tpu_custom_call.1} parent=11 // pred_fallthru
          _
      $region12: #{tpu_custom_call.1} parent=5 // pred_fallthru
        _
      %p141 = scmp.lt.s32.totalorder %s16, 2
      // Predicated region
      $region21: #{tpu_custom_call.1} parent=5 // pred_check
        %p142 = pneg %p141
      $region22: #{tpu_custom_call.1} parent=5 // pred_check_branch
        %144 = sbr.rel (%p142) target = $region24
      $region23: #{tpu_custom_call.1} parent=5 // pred_region
        // Predicated region
        $region25: #{tpu_custom_call.1} parent=23 // pred_check
          %p145 = pneg %p36
        $region26: #{tpu_custom_call.1} parent=23 // pred_check_branch
          %147 = sbr.rel (%p145) target = $region28
        $region27: #{tpu_custom_call.1} parent=23 // pred_region
          %s148 = sand.u32 %s26, 1
          %s149 = scalar_lea.sflag [#allocation3], %s148
          %s150 = sand.u32 %s26, 1
          %s151 = smul.addr %s150, 16
          %s152 = scalar_lea.vmem [#allocation2], %s151
          %s153 = smul.u32 2, %s16
          %s155 = ssub.s32 256, 256
          %156 = vsyncadd %s149, %s155
          %s157 = smul.addr %s153, 128
          %s158 = scalar_lea.hbm %s0, %s157
          %s159 = sshll.u32 %s152, 4
          %s160 = int_to_ptr.vmem [resolvable:$true] %s159
          %165 = dma.hbm_to_vmem [thread:$0]  %s158, 256, %s160, %s149, 128, 128, 8
        $region28: #{tpu_custom_call.1} parent=23 // pred_fallthru
          _
      $region24: #{tpu_custom_call.1} parent=5 // pred_fallthru
        _
      %p166 = scmp.le.s32.totalorder 1, %s16
      %p167 = scmp.lt.s32.totalorder %s16, 3
      %p168 = pnand %p166, %p167
      %p169 = pneg %p168
      // Predicated region
      $region29: #{tpu_custom_call.1} parent=5 // pred_check
        _
      $region30: #{tpu_custom_call.1} parent=5 // pred_check_branch
        %171 = sbr.rel (%p168) target = $region32
      $region31: #{tpu_custom_call.1} parent=5 // pred_region
        %s172 = ssub.s32 %s16, 1
        %s173 = sand.u32 %s29, 1
        %s174 = scalar_lea.sflag [#allocation3], %s173
        %s175 = sand.u32 %s29, 1
        %s176 = smul.addr %s175, 16
        %s177 = scalar_lea.vmem [#allocation2], %s176
        // Predicated region
        $region33: #{tpu_custom_call.1} parent=31 // pred_check
          %p178 = pneg %p42
        $region34: #{tpu_custom_call.1} parent=31 // pred_check_branch
          %180 = sbr.rel (%p178) target = $region36
        $region35: #{tpu_custom_call.1} parent=31 // pred_region
          %181 = dma.done %s174, 256
        $region36: #{tpu_custom_call.1} parent=31 // pred_fallthru
          _
        // Predicated region
        $region37: #{tpu_custom_call.1} parent=31 // pred_check
          %p182 = pneg %p63
        $region38: #{tpu_custom_call.1} parent=31 // pred_check_branch
          %184 = sbr.rel (%p182) target = $region40
        $region39: #{tpu_custom_call.1} parent=31 // pred_region
          %185 = dma.done [#allocation6], 512
        $region40: #{tpu_custom_call.1} parent=31 // pred_fallthru
          _
        %s186 = sand.u32 %s29, 1
        %s187 = scalar_lea.sflag [#allocation3], %s186
        %s188 = sand.u32 %s29, 1
        %s189 = smul.addr %s188, 16
        %s190 = scalar_lea.vmem [#allocation2], %s189
        %p191 = pneg %p42
        %p192 = pneg %p39
        %p193 = pneg %p63
        %p194 = pneg %p60
        %p195 = pneg %p84
        %p196 = pneg %p81
        %p197 = pneg %p110
        %p198 = pneg %p107
        %s199 = sand.u32 %s97, 1
        %s200 = scalar_lea.sflag [#allocation4], %s199
        %s201 = sand.u32 %s97, 1
        %s202 = smul.addr %s201, 16
        %s203 = scalar_lea.vmem [#allocation7], %s202
        %s204 = smul.u32 2, %s21
        %s205 = smul.u32 2, %s21
        %v206 = vld [vmem:[%s177] sm:$0xff]
        %v207 = vld [vmem:[%s177 + $0x8] sm:$0xff]
        %v208 = vld [vmem:[#allocation5] sm:$0xff]
        %v209 = vld [vmem:[#allocation5 + $0x8] sm:$0xff]
        %v210 = vld [vmem:[#allocation5 + $0x10] sm:$0xff]
        %v211 = vld [vmem:[#allocation5 + $0x18] sm:$0xff]
        %v212 = vld [vmem:[%s2] sm:$0x1]
        %v214 = vlaneseq
        %v215 = vshrl.u32 %v214, 7
        %v216 = vsub.s32 0, %v215
        %v217 = vrot.slane %v212, %v216
        %vm219 = vcmask 261120
        %v221 = vsel %vm219, %v206, 0
        %v224 = vsel %vm219, %v207, 0
        %226 = vmatprep.subr.mxu0 0.0
        %227 = vmatpush1.msra.mxu0 0.0
        %228 = vmatprep.subr.mxu0 0.0
        %229 = vmatpush1.msra.mxu0 0.0
        %230 = vmatprep.subr.mxu0 0.0
        %231 = vmatpush1.msra.mxu0 0.0
        %232 = vmatprep.subr.mxu0 0.0
        %233 = vmatpush1.msra.mxu0 0.0
        %234 = vmatprep.subr.mxu0 0.0
        %235 = vmatpush1.msra.mxu0 0.0
        %236 = vmatprep.subr.mxu0 0.0
        %237 = vmatpush1.msra.mxu0 0.0
        %238 = vmatprep.subr.mxu0 0.0
        %239 = vmatpush1.msra.mxu0 0.0
        %240 = vmatprep.subr.mxu0 0.0
        %241 = vmatpush1.msra.mxu0 0.0
        %242 = vmatprep.subr.mxu0 0.0
        %243 = vmatpush1.msra.mxu0 0.0
        %244 = vmatprep.subr.mxu0 0.0
        %245 = vmatpush1.msra.mxu0 0.0
        %246 = vmatprep.subr.mxu0 0.0
        %247 = vmatpush1.msra.mxu0 0.0
        %248 = vmatprep.subr.mxu0 0.0
        %249 = vmatpush1.msra.mxu0 0.0
        %250 = vmatprep.subr.mxu0 0.0
        %v251 = vand.u32 %v211, 4294901760
        %252 = vmatpush1.msra.mxu0 %v251
        %253 = vmatprep.subr.mxu0 0.0
        %v254 = vand.u32 %v210, 4294901760
        %255 = vmatpush1.msra.mxu0 %v254
        %256 = vmatprep.subr.mxu0 0.0
        %v257 = vand.u32 %v209, 4294901760
        %258 = vmatpush1.msra.mxu0 %v257
        %259 = vmatprep.subr.mxu0 0.0
        %v260 = vand.u32 %v208, 4294901760
        %261 = vmatpush1.msra.mxu0 %v260
        %262 = vmatprep.subr.mxu0 0.0
        %263 = vmatpush2.msra.mxu0 0.0
        %264 = vmatprep.subr.mxu0 0.0
        %265 = vmatpush2.msra.mxu0 0.0
        %266 = vmatprep.subr.mxu0 0.0
        %267 = vmatpush2.msra.mxu0 0.0
        %268 = vmatprep.subr.mxu0 0.0
        %269 = vmatpush2.msra.mxu0 0.0
        %270 = vmatprep.subr.mxu0 0.0
        %271 = vmatpush2.msra.mxu0 0.0
        %272 = vmatprep.subr.mxu0 0.0
        %273 = vmatpush2.msra.mxu0 0.0
        %274 = vmatprep.subr.mxu0 0.0
        %275 = vmatpush2.msra.mxu0 0.0
        %276 = vmatprep.subr.mxu0 0.0
        %277 = vmatpush2.msra.mxu0 0.0
        %278 = vmatprep.subr.mxu0 0.0
        %279 = vmatpush2.msra.mxu0 0.0
        %280 = vmatprep.subr.mxu0 0.0
        %281 = vmatpush2.msra.mxu0 0.0
        %282 = vmatprep.subr.mxu0 0.0
        %283 = vmatpush2.msra.mxu0 0.0
        %284 = vmatprep.subr.mxu0 0.0
        %285 = vmatpush2.msra.mxu0 0.0
        %286 = vmatprep.subr.mxu0 0.0
        %287 = vmatpush2.msra.mxu0 0.0
        %288 = vmatprep.subr.mxu0 0.0
        %289 = vmatpush2.msra.mxu0 0.0
        %290 = vmatprep.subr.mxu0 0.0
        %291 = vmatpush2.msra.mxu0 0.0
        %292 = vmatprep.subr.mxu0 0.0
        %293 = vmatpush2.msra.mxu0 0.0
        %294 = vmatprep.mubr.f32.mxu0 0.0
        %v295 = vand.u32 %v221, 4294901760
        %v296 = vsub.f32 %v221, %v295
        %v297 = vand.u32 %v296, 4294901760
        %v298 = vsub.f32 %v296, %v297
        %v299 = vand.u32 %v298, 4294901760
        %300 = vmatmul.mubr.f32.gmra.mxu0 %v299
        %v301 = vpop.f32.mrf.mxu0
        %v302 = vadd.f32 %v217, %v301
        %v303 = vpop.f32.mrf.mxu0
        %304 = vmatprep.mubr.f32.mxu0 0.0
        %v305 = vand.u32 %v224, 4294901760
        %v306 = vsub.f32 %v224, %v305
        %v307 = vand.u32 %v306, 4294901760
        %v308 = vsub.f32 %v306, %v307
        %v309 = vand.u32 %v308, 4294901760
        %310 = vmatmul.mubr.f32.gmra.mxu0 %v309
        %v311 = vpop.f32.mrf.mxu0
        %v312 = vadd.f32 %v217, %v311
        %v313 = vpop.f32.mrf.mxu0
        %314 = vdwg.mxu0
        %315 = vmatprep.subr.mxu0 0.0
        %316 = vmatpush1.msra.mxu0 0.0
        %317 = vmatprep.subr.mxu0 0.0
        %318 = vmatpush1.msra.mxu0 0.0
        %319 = vmatprep.subr.mxu0 0.0
        %320 = vmatpush1.msra.mxu0 0.0
        %321 = vmatprep.subr.mxu0 0.0
        %322 = vmatpush1.msra.mxu0 0.0
        %323 = vmatprep.subr.mxu0 0.0
        %324 = vmatpush1.msra.mxu0 0.0
        %325 = vmatprep.subr.mxu0 0.0
        %326 = vmatpush1.msra.mxu0 0.0
        %327 = vmatprep.subr.mxu0 0.0
        %328 = vmatpush1.msra.mxu0 0.0
        %329 = vmatprep.subr.mxu0 0.0
        %330 = vmatpush1.msra.mxu0 0.0
        %331 = vmatprep.subr.mxu0 0.0
        %332 = vmatpush1.msra.mxu0 0.0
        %333 = vmatprep.subr.mxu0 0.0
        %334 = vmatpush1.msra.mxu0 0.0
        %335 = vmatprep.subr.mxu0 0.0
        %336 = vmatpush1.msra.mxu0 0.0
        %337 = vmatprep.subr.mxu0 0.0
        %338 = vmatpush1.msra.mxu0 0.0
        %339 = vmatprep.subr.mxu0 0.0
        %v340 = vand.u32 %v211, 4294901760
        %v341 = vsub.f32 %v211, %v340
        %v342 = vand.u32 %v341, 4294901760
        %v343 = vsub.f32 %v341, %v342
        %v344 = vand.u32 %v343, 4294901760
        %345 = vmatpush1.msra.mxu0 %v344
        %346 = vmatprep.subr.mxu0 0.0
        %v347 = vand.u32 %v210, 4294901760
        %v348 = vsub.f32 %v210, %v347
        %v349 = vand.u32 %v348, 4294901760
        %v350 = vsub.f32 %v348, %v349
        %v351 = vand.u32 %v350, 4294901760
        %352 = vmatpush1.msra.mxu0 %v351
        %353 = vmatprep.subr.mxu0 0.0
        %v354 = vand.u32 %v209, 4294901760
        %v355 = vsub.f32 %v209, %v354
        %v356 = vand.u32 %v355, 4294901760
        %v357 = vsub.f32 %v355, %v356
        %v358 = vand.u32 %v357, 4294901760
        %359 = vmatpush1.msra.mxu0 %v358
        %360 = vmatprep.subr.mxu0 0.0
        %v361 = vand.u32 %v208, 4294901760
        %v362 = vsub.f32 %v208, %v361
        %v363 = vand.u32 %v362, 4294901760
        %v364 = vsub.f32 %v362, %v363
        %v365 = vand.u32 %v364, 4294901760
        %366 = vmatpush1.msra.mxu0 %v365
        %367 = vmatprep.subr.mxu0 0.0
        %368 = vmatpush2.msra.mxu0 0.0
        %369 = vmatprep.subr.mxu0 0.0
        %370 = vmatpush2.msra.mxu0 0.0
        %371 = vmatprep.subr.mxu0 0.0
        %372 = vmatpush2.msra.mxu0 0.0
        %373 = vmatprep.subr.mxu0 0.0
        %374 = vmatpush2.msra.mxu0 0.0
        %375 = vmatprep.subr.mxu0 0.0
        %376 = vmatpush2.msra.mxu0 0.0
        %377 = vmatprep.subr.mxu0 0.0
        %378 = vmatpush2.msra.mxu0 0.0
        %379 = vmatprep.subr.mxu0 0.0
        %380 = vmatpush2.msra.mxu0 0.0
        %381 = vmatprep.subr.mxu0 0.0
        %382 = vmatpush2.msra.mxu0 0.0
        %383 = vmatprep.subr.mxu0 0.0
        %384 = vmatpush2.msra.mxu0 0.0
        %385 = vmatprep.subr.mxu0 0.0
        %386 = vmatpush2.msra.mxu0 0.0
        %387 = vmatprep.subr.mxu0 0.0
        %388 = vmatpush2.msra.mxu0 0.0
        %389 = vmatprep.subr.mxu0 0.0
        %390 = vmatpush2.msra.mxu0 0.0
        %391 = vmatprep.subr.mxu0 0.0
        %392 = vmatpush2.msra.mxu0 0.0
        %393 = vmatprep.subr.mxu0 0.0
        %394 = vmatpush2.msra.mxu0 0.0
        %395 = vmatprep.subr.mxu0 0.0
        %396 = vmatpush2.msra.mxu0 0.0
        %397 = vmatprep.subr.mxu0 0.0
        %398 = vmatpush2.msra.mxu0 0.0
        %399 = vmatprep.mubr.f32.mxu0 0.0
        %v400 = vand.u32 %v221, 4294901760
        %401 = vmatmul.mubr.f32.gmra.mxu0 %v400
        %v402 = vpop.f32.mrf.mxu0
        %v403 = vadd.f32 %v302, %v402
        %v404 = vpop.f32.mrf.mxu0
        %405 = vmatprep.mubr.f32.mxu0 0.0
        %v406 = vand.u32 %v224, 4294901760
        %407 = vmatmul.mubr.f32.gmra.mxu0 %v406
        %v408 = vpop.f32.mrf.mxu0
        %v409 = vadd.f32 %v312, %v408
        %v410 = vpop.f32.mrf.mxu0
        %411 = vdwg.mxu0
        %412 = vmatprep.subr.mxu0 0.0
        %413 = vmatpush1.msra.mxu0 0.0
        %414 = vmatprep.subr.mxu0 0.0
        %415 = vmatpush1.msra.mxu0 0.0
        %416 = vmatprep.subr.mxu0 0.0
        %417 = vmatpush1.msra.mxu0 0.0
        %418 = vmatprep.subr.mxu0 0.0
        %419 = vmatpush1.msra.mxu0 0.0
        %420 = vmatprep.subr.mxu0 0.0
        %421 = vmatpush1.msra.mxu0 0.0
        %422 = vmatprep.subr.mxu0 0.0
        %423 = vmatpush1.msra.mxu0 0.0
        %424 = vmatprep.subr.mxu0 0.0
        %425 = vmatpush1.msra.mxu0 0.0
        %426 = vmatprep.subr.mxu0 0.0
        %427 = vmatpush1.msra.mxu0 0.0
        %428 = vmatprep.subr.mxu0 0.0
        %429 = vmatpush1.msra.mxu0 0.0
        %430 = vmatprep.subr.mxu0 0.0
        %431 = vmatpush1.msra.mxu0 0.0
        %432 = vmatprep.subr.mxu0 0.0
        %433 = vmatpush1.msra.mxu0 0.0
        %434 = vmatprep.subr.mxu0 0.0
        %435 = vmatpush1.msra.mxu0 0.0
        %436 = vmatprep.subr.mxu0 0.0
        %v437 = vand.u32 %v211, 4294901760
        %v438 = vsub.f32 %v211, %v437
        %439 = vmatpush1.msra.mxu0 %v438
        %440 = vmatprep.subr.mxu0 0.0
        %v441 = vand.u32 %v210, 4294901760
        %v442 = vsub.f32 %v210, %v441
        %443 = vmatpush1.msra.mxu0 %v442
        %444 = vmatprep.subr.mxu0 0.0
        %v445 = vand.u32 %v209, 4294901760
        %v446 = vsub.f32 %v209, %v445
        %447 = vmatpush1.msra.mxu0 %v446
        %448 = vmatprep.subr.mxu0 0.0
        %v449 = vand.u32 %v208, 4294901760
        %v450 = vsub.f32 %v208, %v449
        %451 = vmatpush1.msra.mxu0 %v450
        %452 = vmatprep.subr.mxu0 0.0
        %453 = vmatpush2.msra.mxu0 0.0
        %454 = vmatprep.subr.mxu0 0.0
        %455 = vmatpush2.msra.mxu0 0.0
        %456 = vmatprep.subr.mxu0 0.0
        %457 = vmatpush2.msra.mxu0 0.0
        %458 = vmatprep.subr.mxu0 0.0
        %459 = vmatpush2.msra.mxu0 0.0
        %460 = vmatprep.subr.mxu0 0.0
        %461 = vmatpush2.msra.mxu0 0.0
        %462 = vmatprep.subr.mxu0 0.0
        %463 = vmatpush2.msra.mxu0 0.0
        %464 = vmatprep.subr.mxu0 0.0
        %465 = vmatpush2.msra.mxu0 0.0
        %466 = vmatprep.subr.mxu0 0.0
        %467 = vmatpush2.msra.mxu0 0.0
        %468 = vmatprep.subr.mxu0 0.0
        %469 = vmatpush2.msra.mxu0 0.0
        %470 = vmatprep.subr.mxu0 0.0
        %471 = vmatpush2.msra.mxu0 0.0
        %472 = vmatprep.subr.mxu0 0.0
        %473 = vmatpush2.msra.mxu0 0.0
        %474 = vmatprep.subr.mxu0 0.0
        %475 = vmatpush2.msra.mxu0 0.0
        %476 = vmatprep.subr.mxu0 0.0
        %477 = vmatpush2.msra.mxu0 0.0
        %478 = vmatprep.subr.mxu0 0.0
        %479 = vmatpush2.msra.mxu0 0.0
        %480 = vmatprep.subr.mxu0 0.0
        %481 = vmatpush2.msra.mxu0 0.0
        %482 = vmatprep.subr.mxu0 0.0
        %483 = vmatpush2.msra.mxu0 0.0
        %484 = vmatprep.mubr.f32.mxu0 0.0
        %v485 = vand.u32 %v221, 4294901760
        %v486 = vsub.f32 %v221, %v485
        %487 = vmatmul.mubr.f32.gmra.mxu0 %v486
        %v488 = vpop.f32.mrf.mxu0
        %v489 = vadd.f32 %v403, %v488
        %v490 = vpop.f32.mrf.mxu0
        %491 = vmatprep.mubr.f32.mxu0 0.0
        %v492 = vand.u32 %v224, 4294901760
        %v493 = vsub.f32 %v224, %v492
        %494 = vmatmul.mubr.f32.gmra.mxu0 %v493
        %v495 = vpop.f32.mrf.mxu0
        %v496 = vadd.f32 %v409, %v495
        %v497 = vpop.f32.mrf.mxu0
        %498 = vdwg.mxu0
        %499 = vmatprep.subr.mxu0 0.0
        %500 = vmatpush1.msra.mxu0 0.0
        %501 = vmatprep.subr.mxu0 0.0
        %502 = vmatpush1.msra.mxu0 0.0
        %503 = vmatprep.subr.mxu0 0.0
        %504 = vmatpush1.msra.mxu0 0.0
        %505 = vmatprep.subr.mxu0 0.0
        %506 = vmatpush1.msra.mxu0 0.0
        %507 = vmatprep.subr.mxu0 0.0
        %508 = vmatpush1.msra.mxu0 0.0
        %509 = vmatprep.subr.mxu0 0.0
        %510 = vmatpush1.msra.mxu0 0.0
        %511 = vmatprep.subr.mxu0 0.0
        %512 = vmatpush1.msra.mxu0 0.0
        %513 = vmatprep.subr.mxu0 0.0
        %514 = vmatpush1.msra.mxu0 0.0
        %515 = vmatprep.subr.mxu0 0.0
        %516 = vmatpush1.msra.mxu0 0.0
        %517 = vmatprep.subr.mxu0 0.0
        %518 = vmatpush1.msra.mxu0 0.0
        %519 = vmatprep.subr.mxu0 0.0
        %520 = vmatpush1.msra.mxu0 0.0
        %521 = vmatprep.subr.mxu0 0.0
        %522 = vmatpush1.msra.mxu0 0.0
        %523 = vmatprep.subr.mxu0 0.0
        %v524 = vand.u32 %v211, 4294901760
        %525 = vmatpush1.msra.mxu0 %v524
        %526 = vmatprep.subr.mxu0 0.0
        %v527 = vand.u32 %v210, 4294901760
        %528 = vmatpush1.msra.mxu0 %v527
        %529 = vmatprep.subr.mxu0 0.0
        %v530 = vand.u32 %v209, 4294901760
        %531 = vmatpush1.msra.mxu0 %v530
        %532 = vmatprep.subr.mxu0 0.0
        %v533 = vand.u32 %v208, 4294901760
        %534 = vmatpush1.msra.mxu0 %v533
        %535 = vmatprep.subr.mxu0 0.0
        %536 = vmatpush2.msra.mxu0 0.0
        %537 = vmatprep.subr.mxu0 0.0
        %538 = vmatpush2.msra.mxu0 0.0
        %539 = vmatprep.subr.mxu0 0.0
        %540 = vmatpush2.msra.mxu0 0.0
        %541 = vmatprep.subr.mxu0 0.0
        %542 = vmatpush2.msra.mxu0 0.0
        %543 = vmatprep.subr.mxu0 0.0
        %544 = vmatpush2.msra.mxu0 0.0
        %545 = vmatprep.subr.mxu0 0.0
        %546 = vmatpush2.msra.mxu0 0.0
        %547 = vmatprep.subr.mxu0 0.0
        %548 = vmatpush2.msra.mxu0 0.0
        %549 = vmatprep.subr.mxu0 0.0
        %550 = vmatpush2.msra.mxu0 0.0
        %551 = vmatprep.subr.mxu0 0.0
        %552 = vmatpush2.msra.mxu0 0.0
        %553 = vmatprep.subr.mxu0 0.0
        %554 = vmatpush2.msra.mxu0 0.0
        %555 = vmatprep.subr.mxu0 0.0
        %556 = vmatpush2.msra.mxu0 0.0
        %557 = vmatprep.subr.mxu0 0.0
        %558 = vmatpush2.msra.mxu0 0.0
        %559 = vmatprep.subr.mxu0 0.0
        %560 = vmatpush2.msra.mxu0 0.0
        %561 = vmatprep.subr.mxu0 0.0
        %562 = vmatpush2.msra.mxu0 0.0
        %563 = vmatprep.subr.mxu0 0.0
        %564 = vmatpush2.msra.mxu0 0.0
        %565 = vmatprep.subr.mxu0 0.0
        %566 = vmatpush2.msra.mxu0 0.0
        %567 = vmatprep.mubr.f32.mxu0 0.0
        %v568 = vand.u32 %v221, 4294901760
        %v569 = vsub.f32 %v221, %v568
        %v570 = vand.u32 %v569, 4294901760
        %571 = vmatmul.mubr.f32.gmra.mxu0 %v570
        %v572 = vpop.f32.mrf.mxu0
        %v573 = vadd.f32 %v489, %v572
        %v574 = vpop.f32.mrf.mxu0
        %575 = vmatprep.mubr.f32.mxu0 0.0
        %v576 = vand.u32 %v224, 4294901760
        %v577 = vsub.f32 %v224, %v576
        %v578 = vand.u32 %v577, 4294901760
        %579 = vmatmul.mubr.f32.gmra.mxu0 %v578
        %v580 = vpop.f32.mrf.mxu0
        %v581 = vadd.f32 %v496, %v580
        %v582 = vpop.f32.mrf.mxu0
        %583 = vdwg.mxu0
        %584 = vmatprep.subr.mxu0 0.0
        %585 = vmatpush1.msra.mxu0 0.0
        %586 = vmatprep.subr.mxu0 0.0
        %587 = vmatpush1.msra.mxu0 0.0
        %588 = vmatprep.subr.mxu0 0.0
        %589 = vmatpush1.msra.mxu0 0.0
        %590 = vmatprep.subr.mxu0 0.0
        %591 = vmatpush1.msra.mxu0 0.0
        %592 = vmatprep.subr.mxu0 0.0
        %593 = vmatpush1.msra.mxu0 0.0
        %594 = vmatprep.subr.mxu0 0.0
        %595 = vmatpush1.msra.mxu0 0.0
        %596 = vmatprep.subr.mxu0 0.0
        %597 = vmatpush1.msra.mxu0 0.0
        %598 = vmatprep.subr.mxu0 0.0
        %599 = vmatpush1.msra.mxu0 0.0
        %600 = vmatprep.subr.mxu0 0.0
        %601 = vmatpush1.msra.mxu0 0.0
        %602 = vmatprep.subr.mxu0 0.0
        %603 = vmatpush1.msra.mxu0 0.0
        %604 = vmatprep.subr.mxu0 0.0
        %605 = vmatpush1.msra.mxu0 0.0
        %606 = vmatprep.subr.mxu0 0.0
        %607 = vmatpush1.msra.mxu0 0.0
        %608 = vmatprep.subr.mxu0 0.0
        %v609 = vand.u32 %v211, 4294901760
        %v610 = vsub.f32 %v211, %v609
        %v611 = vand.u32 %v610, 4294901760
        %612 = vmatpush1.msra.mxu0 %v611
        %613 = vmatprep.subr.mxu0 0.0
        %v614 = vand.u32 %v210, 4294901760
        %v615 = vsub.f32 %v210, %v614
        %v616 = vand.u32 %v615, 4294901760
        %617 = vmatpush1.msra.mxu0 %v616
        %618 = vmatprep.subr.mxu0 0.0
        %v619 = vand.u32 %v209, 4294901760
        %v620 = vsub.f32 %v209, %v619
        %v621 = vand.u32 %v620, 4294901760
        %622 = vmatpush1.msra.mxu0 %v621
        %623 = vmatprep.subr.mxu0 0.0
        %v624 = vand.u32 %v208, 4294901760
        %v625 = vsub.f32 %v208, %v624
        %v626 = vand.u32 %v625, 4294901760
        %627 = vmatpush1.msra.mxu0 %v626
        %628 = vmatprep.subr.mxu0 0.0
        %629 = vmatpush2.msra.mxu0 0.0
        %630 = vmatprep.subr.mxu0 0.0
        %631 = vmatpush2.msra.mxu0 0.0
        %632 = vmatprep.subr.mxu0 0.0
        %633 = vmatpush2.msra.mxu0 0.0
        %634 = vmatprep.subr.mxu0 0.0
        %635 = vmatpush2.msra.mxu0 0.0
        %636 = vmatprep.subr.mxu0 0.0
        %637 = vmatpush2.msra.mxu0 0.0
        %638 = vmatprep.subr.mxu0 0.0
        %639 = vmatpush2.msra.mxu0 0.0
        %640 = vmatprep.subr.mxu0 0.0
        %641 = vmatpush2.msra.mxu0 0.0
        %642 = vmatprep.subr.mxu0 0.0
        %643 = vmatpush2.msra.mxu0 0.0
        %644 = vmatprep.subr.mxu0 0.0
        %645 = vmatpush2.msra.mxu0 0.0
        %646 = vmatprep.subr.mxu0 0.0
        %647 = vmatpush2.msra.mxu0 0.0
        %648 = vmatprep.subr.mxu0 0.0
        %649 = vmatpush2.msra.mxu0 0.0
        %650 = vmatprep.subr.mxu0 0.0
        %651 = vmatpush2.msra.mxu0 0.0
        %652 = vmatprep.subr.mxu0 0.0
        %653 = vmatpush2.msra.mxu0 0.0
        %654 = vmatprep.subr.mxu0 0.0
        %655 = vmatpush2.msra.mxu0 0.0
        %656 = vmatprep.subr.mxu0 0.0
        %657 = vmatpush2.msra.mxu0 0.0
        %658 = vmatprep.subr.mxu0 0.0
        %659 = vmatpush2.msra.mxu0 0.0
        %660 = vmatprep.mubr.f32.mxu0 0.0
        %v661 = vand.u32 %v221, 4294901760
        %662 = vmatmul.mubr.f32.gmra.mxu0 %v661
        %v663 = vpop.f32.mrf.mxu0
        %v664 = vadd.f32 %v573, %v663
        %v665 = vpop.f32.mrf.mxu0
        %666 = vmatprep.mubr.f32.mxu0 0.0
        %v667 = vand.u32 %v224, 4294901760
        %668 = vmatmul.mubr.f32.gmra.mxu0 %v667
        %v669 = vpop.f32.mrf.mxu0
        %v670 = vadd.f32 %v581, %v669
        %v671 = vpop.f32.mrf.mxu0
        %672 = vdwg.mxu0
        %673 = vmatprep.subr.mxu0 0.0
        %674 = vmatpush1.msra.mxu0 0.0
        %675 = vmatprep.subr.mxu0 0.0
        %676 = vmatpush1.msra.mxu0 0.0
        %677 = vmatprep.subr.mxu0 0.0
        %678 = vmatpush1.msra.mxu0 0.0
        %679 = vmatprep.subr.mxu0 0.0
        %680 = vmatpush1.msra.mxu0 0.0
        %681 = vmatprep.subr.mxu0 0.0
        %682 = vmatpush1.msra.mxu0 0.0
        %683 = vmatprep.subr.mxu0 0.0
        %684 = vmatpush1.msra.mxu0 0.0
        %685 = vmatprep.subr.mxu0 0.0
        %686 = vmatpush1.msra.mxu0 0.0
        %687 = vmatprep.subr.mxu0 0.0
        %688 = vmatpush1.msra.mxu0 0.0
        %689 = vmatprep.subr.mxu0 0.0
        %690 = vmatpush1.msra.mxu0 0.0
        %691 = vmatprep.subr.mxu0 0.0
        %692 = vmatpush1.msra.mxu0 0.0
        %693 = vmatprep.subr.mxu0 0.0
        %694 = vmatpush1.msra.mxu0 0.0
        %695 = vmatprep.subr.mxu0 0.0
        %696 = vmatpush1.msra.mxu0 0.0
        %697 = vmatprep.subr.mxu0 0.0
        %v698 = vand.u32 %v211, 4294901760
        %699 = vmatpush1.msra.mxu0 %v698
        %700 = vmatprep.subr.mxu0 0.0
        %v701 = vand.u32 %v210, 4294901760
        %702 = vmatpush1.msra.mxu0 %v701
        %703 = vmatprep.subr.mxu0 0.0
        %v704 = vand.u32 %v209, 4294901760
        %705 = vmatpush1.msra.mxu0 %v704
        %706 = vmatprep.subr.mxu0 0.0
        %v707 = vand.u32 %v208, 4294901760
        %708 = vmatpush1.msra.mxu0 %v707
        %709 = vmatprep.subr.mxu0 0.0
        %710 = vmatpush2.msra.mxu0 0.0
        %711 = vmatprep.subr.mxu0 0.0
        %712 = vmatpush2.msra.mxu0 0.0
        %713 = vmatprep.subr.mxu0 0.0
        %714 = vmatpush2.msra.mxu0 0.0
        %715 = vmatprep.subr.mxu0 0.0
        %716 = vmatpush2.msra.mxu0 0.0
        %717 = vmatprep.subr.mxu0 0.0
        %718 = vmatpush2.msra.mxu0 0.0
        %719 = vmatprep.subr.mxu0 0.0
        %720 = vmatpush2.msra.mxu0 0.0
        %721 = vmatprep.subr.mxu0 0.0
        %722 = vmatpush2.msra.mxu0 0.0
        %723 = vmatprep.subr.mxu0 0.0
        %724 = vmatpush2.msra.mxu0 0.0
        %725 = vmatprep.subr.mxu0 0.0
        %726 = vmatpush2.msra.mxu0 0.0
        %727 = vmatprep.subr.mxu0 0.0
        %728 = vmatpush2.msra.mxu0 0.0
        %729 = vmatprep.subr.mxu0 0.0
        %730 = vmatpush2.msra.mxu0 0.0
        %731 = vmatprep.subr.mxu0 0.0
        %732 = vmatpush2.msra.mxu0 0.0
        %733 = vmatprep.subr.mxu0 0.0
        %734 = vmatpush2.msra.mxu0 0.0
        %735 = vmatprep.subr.mxu0 0.0
        %736 = vmatpush2.msra.mxu0 0.0
        %737 = vmatprep.subr.mxu0 0.0
        %738 = vmatpush2.msra.mxu0 0.0
        %739 = vmatprep.subr.mxu0 0.0
        %740 = vmatpush2.msra.mxu0 0.0
        %741 = vmatprep.mubr.f32.mxu0 0.0
        %v742 = vand.u32 %v221, 4294901760
        %743 = vmatmul.mubr.f32.gmra.mxu0 %v742
        %v744 = vpop.f32.mrf.mxu0
        %v745 = vadd.f32 %v664, %v744
        %v746 = vpop.f32.mrf.mxu0
        %747 = vmatprep.mubr.f32.mxu0 0.0
        %v748 = vand.u32 %v224, 4294901760
        %749 = vmatmul.mubr.f32.gmra.mxu0 %v748
        %v750 = vpop.f32.mrf.mxu0
        %v751 = vadd.f32 %v670, %v750
        %v752 = vpop.f32.mrf.mxu0
        %753 = vdwg.mxu0
        %v754 = vmax.f32 %v745, 0.0
        %v755 = vmax.f32 %v751, 0.0
        %v756 = vsub.f32 0.0, %v754
        %v757 = vsub.f32 0.0, %v755
        %v758 = vmul.f32 %v756, 1.442695
        %v759 = vpow.pop %v758
        %v760 = vmul.f32 %v757, 1.442695
        %v761 = vpow.pop %v760
        %v762 = vadd.f32 %v759, 1.0
        %v763 = vadd.f32 %v761, 1.0
        %v764 = vrcp.pop %v762
        %v765 = vrcp.pop %v763
        %v766 = vmul.f32 %v764, 4.0
        %v767 = vmul.f32 %v765, 4.0
        %v768 = vadd.f32 %v766, 1.0
        %v769 = vadd.f32 %v767, 1.0
        %770 = vst [vmem:[%s203] sm:$0xff] %v768
        %771 = vst [vmem:[%s203 + $0x8] sm:$0xff] %v769
        %s772 = sand.u32 %s97, 1
        %s773 = scalar_lea.sflag [#allocation4], %s772
        %s774 = sand.u32 %s97, 1
        %s775 = smul.addr %s774, 16
        %s776 = scalar_lea.vmem [#allocation7], %s775
        // Predicated region
        $region41: #{tpu_custom_call.1} parent=31 // pred_check
          %p777 = pneg %p107
        $region42: #{tpu_custom_call.1} parent=31 // pred_check_branch
          %779 = sbr.rel (%p777) target = $region44
        $region43: #{tpu_custom_call.1} parent=31 // pred_region
          %s780 = smul.u32 2, %s21
          %s782 = ssub.s32 256, 256
          %783 = vsyncadd %s773, %s782
          %s784 = smul.addr %s780, 128
          %s785 = scalar_lea.hbm %s3, %s784
          %s786 = sshll.u32 %s776, 4
          %s787 = int_to_ptr.vmem [resolvable:$true] %s786
          %792 = dma.vmem_to_hbm [thread:$0]  %s787, 256, %s785, %s773, 128, 128, 8
        $region44: #{tpu_custom_call.1} parent=31 // pred_fallthru
          _
      $region32: #{tpu_custom_call.1} parent=5 // pred_fallthru
        _
      %p793 = scmp.le.s32.totalorder 2, %s16
      // Predicated region
      $region45: #{tpu_custom_call.1} parent=5 // pred_check
        %p794 = pneg %p793
      $region46: #{tpu_custom_call.1} parent=5 // pred_check_branch
        %796 = sbr.rel (%p794) target = $region48
      $region47: #{tpu_custom_call.1} parent=5 // pred_region
        %s797 = ssub.s32 %s16, 2
        // Predicated region
        $region49: #{tpu_custom_call.1} parent=47 // pred_check
          %p798 = pneg %p113
        $region50: #{tpu_custom_call.1} parent=47 // pred_check_branch
          %800 = sbr.rel (%p798) target = $region52
        $region51: #{tpu_custom_call.1} parent=47 // pred_region
          %s801 = sand.u32 %s98, 1
          %s802 = scalar_lea.sflag [#allocation4], %s801
          %s803 = sand.u32 %s98, 1
          %s804 = smul.addr %s803, 16
          %s805 = scalar_lea.vmem [#allocation7], %s804
          %806 = dma.done %s802, 256
        $region52: #{tpu_custom_call.1} parent=47 // pred_fallthru
          _
      $region48: #{tpu_custom_call.1} parent=5 // pred_fallthru
        _
    $region6: #{tpu_custom_call.1} parent=1 // loop_footer
      %s20 = sadd.s32 1, %s16
    $region7: #{tpu_custom_call.1} parent=1 // loop_footer_branch
      %15 = sbr.rel target = $region3
    $region8: #{tpu_custom_call.1} parent=1 // loop_exit
      _
    %807 = vsyncpa [#allocation3], 1
    %s808 = scalar_lea.sflag [#allocation3], 1
    %809 = vsyncpa %s808, 1
    %810 = vsyncpa [#allocation6], 1
    %811 = vsyncpa [#allocation4], 1
    %s812 = scalar_lea.sflag [#allocation4], 1
    %813 = vsyncpa %s812, 1

</llo_original>
